<compile_context>
chip_gen: v7x
topology: tpu7x:2x2x1
jax: 0.10.0
libtpu: 0.0.40
codegen_flags: <defaults>
</compile_context>

<pallas_src>
import functools

import jax
import jax.numpy as jnp
from jax.experimental import pallas as pl
from jax.experimental.pallas import tpu as pltpu

LANE = 128     # TPU vreg lane width
SUBLANE = 8    # TPU vreg sublane width (f32)


def _round_up(x: int, m: int) -> int:
    return (x + m - 1) // m * m


def _make_mlp_kernel(n_hidden_layers: int, compute_dtype=jnp.float32):
    """Fused MLP kernel.

    Ref order: (x, W0, b0, W1, b1, ..., W_out, b_out, out).
      x block:   (tile_rows, n_in)        -- one row-tile of the (padded) batch
      W_i:       (fan_in, fan_out_pad)    -- full array, resident across grid steps
      b_i:       (1, fan_out_pad)         -- full array, resident across grid steps
      out block: (tile_rows, out_pad)     -- lane-dense (out_pad multiple of 128)
    """

    def kernel(*refs):
        x_ref = refs[0]
        o_ref = refs[-1]
        p = refs[1:-1]

        out = x_ref[...].astype(compute_dtype)
        for i in range(n_hidden_layers):
            w = p[2 * i][...].astype(compute_dtype)
            b = p[2 * i + 1][...]                        # f32 (1, H_pad)
            h = jnp.dot(out, w, preferred_element_type=jnp.float32) + b
            out = jnp.tanh(h).astype(compute_dtype)      # bias add / tanh in f32 (v5e-safe)
        w_out = p[-2][...].astype(compute_dtype)
        b_out = p[-1][...]
        o_ref[...] = (
            jnp.dot(out, w_out, preferred_element_type=jnp.float32) + b_out
        ).astype(o_ref.dtype)

    return kernel


def pad_params(params):
    """Zero-pad weights/biases for lane-dense VMEM compute.

    Every fan-out is padded to a multiple of 128. Fan-in is padded to 128 for all layers
    EXCEPT the first (its fan-in stays at the true input width so the x tile is DMA'd at
    its natural width -> no wasted input HBM traffic). Zero padding is exact: padded
    input rows / output columns contribute 0, and tanh(0) = 0 keeps padded hidden lanes
    at zero through the whole stack.
    """
    padded = []
    n_layers = len(params) // 2
    for li in range(n_layers):
        w, b = params[2 * li], params[2 * li + 1]
        fi, fo = w.shape
        fi_p = fi if li == 0 else _round_up(fi, LANE)
        fo_p = _round_up(fo, LANE)
        wp = jnp.zeros((fi_p, fo_p), w.dtype).at[:fi, :fo].set(w)
        bp = jnp.zeros((1, fo_p), b.dtype).at[:, :fo].set(b)
        padded.extend([wp, bp])
    return padded


def mlp_forward(x, padded_params, *, n_hidden_layers, n_outputs,
                tile_rows=256, compute_dtype=jnp.float32):
    """x: (batch, n_inputs) f32. padded_params: output of pad_params()."""
    batch, n_in = x.shape
    assert padded_params[0].shape[0] == n_in, "first-layer fan-in must match x width"
    out_pad = padded_params[-1].shape[1]

    # Row tile: as big as requested, but never bigger than the (sublane-rounded) batch.
    tile_rows = max(SUBLANE, min(tile_rows, _round_up(batch, SUBLANE)))
    batch_pad = _round_up(batch, tile_rows)
    if batch_pad != batch:
        x_p = jnp.zeros((batch_pad, n_in), x.dtype).at[:batch].set(x)
    else:
        x_p = x

    kernel = _make_mlp_kernel(n_hidden_layers, compute_dtype=compute_dtype)
    grid = (batch_pad // tile_rows,)

    # Row-tile moves with the grid; weights/biases use a constant block index so they
    # are DMA'd once and stay resident in VMEM across all grid steps.
    in_specs = [pl.BlockSpec((tile_rows, n_in), lambda i: (i, 0))]
    for p in padded_params:
        in_specs.append(pl.BlockSpec(p.shape, lambda i: (0, 0)))

    out_padded = pl.pallas_call(
        kernel,
        out_shape=jax.ShapeDtypeStruct((batch_pad, out_pad), jnp.float32),
        grid=grid,
        in_specs=in_specs,
        out_specs=pl.BlockSpec((tile_rows, out_pad), lambda i: (i, 0)),
        compiler_params=pltpu.CompilerParams(
            dimension_semantics=("parallel",),  # independent row tiles -> megacore/dual-TC
        ),
    )(x_p, *padded_params)

    return out_padded[:batch, :n_outputs]


def init_params(key, n_inputs, n_outputs, n_hidden_layers, n_hidden_nodes):
    """PyTorch-style Linear init (uniform +/- 1/sqrt(fan_in)).
    Weights returned pre-transposed as (in,out); biases as (1,out)."""
    dims = []
    for n in range(n_hidden_layers):
        fan_in = n_inputs if n == 0 else n_hidden_nodes
        dims.append((fan_in, n_hidden_nodes))
    dims.append((n_hidden_nodes, n_outputs))

    params = []
    for fan_in, fan_out in dims:
        key, kw, kb = jax.random.split(key, 3)
        bound = 1.0 / jnp.sqrt(jnp.float32(fan_in))
        w = jax.random.uniform(kw, (fan_in, fan_out), jnp.float32, -bound, bound)
        b = jax.random.uniform(kb, (1, fan_out), jnp.float32, -bound, bound)
        params.extend([w, b])
    return params


def reference_forward(x, params, n_hidden_layers):
    out = x
    for i in range(n_hidden_layers):
        out = jnp.tanh(out @ params[2 * i] + params[2 * i + 1])
    return out @ params[-2] + params[-1]


if __name__ == "__main__":
    # Net(N_inputs=16, N_outputs=8, N_hidden_layers=2, N_hidden_nodes=32,
    #     activation=torch.tanh, output_activation=None)
    N_INPUTS, N_OUTPUTS = 16, 8
    N_HIDDEN_LAYERS, N_HIDDEN_NODES = 2, 32
    BATCH = 512          # gridded over row tiles of 128 (4 grid steps)
    TILE_ROWS = 128

    key = jax.random.PRNGKey(0)
    key, kx = jax.random.split(key)
    x = jax.random.normal(kx, (BATCH, N_INPUTS), jnp.float32)

    params = init_params(key, N_INPUTS, N_OUTPUTS, N_HIDDEN_LAYERS, N_HIDDEN_NODES)
    padded_params = pad_params(params)   # one-time lane padding of weights/biases

    # compute_dtype=jnp.bfloat16 is the recommended throughput setting on v6e/v7x;
    # f32 here so the numerical check against the pure-JAX reference is tight.
    run = jax.jit(
        functools.partial(
            mlp_forward,
            n_hidden_layers=N_HIDDEN_LAYERS,
            n_outputs=N_OUTPUTS,
            tile_rows=TILE_ROWS,
            compute_dtype=jnp.float32,
        )
    )

    out = jax.block_until_ready(run(x, padded_params))
    ref = reference_forward(x, params, N_HIDDEN_LAYERS)
    assert out.shape == (BATCH, N_OUTPUTS)
    assert jnp.allclose(out, ref, atol=1e-5, rtol=1e-5)

    # Ragged-batch path (batch not a multiple of the tile) — exercises batch padding.
    x_small = x[:37]
    out_small = jax.block_until_ready(run(x_small, padded_params))
    ref_small = reference_forward(x_small, params, N_HIDDEN_LAYERS)
    assert out_small.shape == (37, N_OUTPUTS)
    assert jnp.allclose(out_small, ref_small, atol=1e-5, rtol=1e-5)

    print("KERNEL_OK")
</pallas_src>

<mosaic_0001>
module attributes {stable_mosaic.version = 11 : i64} {
  func.func @kernel(%arg0: i32, %arg1: memref<128x16xf32, #tpu.memory_space<vmem>>, %arg2: memref<16x128xf32, #tpu.memory_space<vmem>>, %arg3: memref<1x128xf32, #tpu.memory_space<vmem>>, %arg4: memref<128x128xf32, #tpu.memory_space<vmem>>, %arg5: memref<1x128xf32, #tpu.memory_space<vmem>>, %arg6: memref<128x128xf32, #tpu.memory_space<vmem>>, %arg7: memref<1x128xf32, #tpu.memory_space<vmem>>, %arg8: memref<128x128xf32, #tpu.memory_space<vmem>>) attributes {dimension_semantics = [#tpu.dimension_semantics<parallel>], iteration_bounds = array<i64: 4>, scalar_prefetch = 0 : i64, scratch_operands = 0 : i64, tpu.core_type = #tpu.core_type<tc>, window_params = [{transform_indices = @transform_0, window_bounds = array<i64: 128, 16>}, {pipeline_mode = #tpu.pipeline_mode<synchronous>, transform_indices = @transform_1, window_bounds = array<i64: 16, 128>}, {pipeline_mode = #tpu.pipeline_mode<synchronous>, transform_indices = @transform_2, window_bounds = array<i64: 1, 128>}, {pipeline_mode = #tpu.pipeline_mode<synchronous>, transform_indices = @transform_3, window_bounds = array<i64: 128, 128>}, {pipeline_mode = #tpu.pipeline_mode<synchronous>, transform_indices = @transform_4, window_bounds = array<i64: 1, 128>}, {pipeline_mode = #tpu.pipeline_mode<synchronous>, transform_indices = @transform_5, window_bounds = array<i64: 128, 128>}, {pipeline_mode = #tpu.pipeline_mode<synchronous>, transform_indices = @transform_6, window_bounds = array<i64: 1, 128>}, {transform_indices = @transform_7, window_bounds = array<i64: 128, 128>}]} {
    %c0 = arith.constant 0 : index
    %c0_0 = arith.constant 0 : index
    %0 = vector.load %arg1[%c0, %c0_0] : memref<128x16xf32, #tpu.memory_space<vmem>>, vector<128x16xf32>
    %c0_1 = arith.constant 0 : index
    %c0_2 = arith.constant 0 : index
    %1 = vector.load %arg2[%c0_1, %c0_2] : memref<16x128xf32, #tpu.memory_space<vmem>>, vector<16x128xf32>
    %c0_3 = arith.constant 0 : index
    %c0_4 = arith.constant 0 : index
    %2 = vector.load %arg3[%c0_3, %c0_4] : memref<1x128xf32, #tpu.memory_space<vmem>>, vector<1x128xf32>
    %cst = arith.constant dense<0.000000e+00> : vector<128x128xf32>
    %3 = tpu.matmul %0, %1, %cst {dimension_numbers = #tpu.dot_dimension_numbers<[1], [0], [0], [1], [0, 0, 1, 1], [], []>} : vector<128x16xf32>, vector<16x128xf32>, vector<128x128xf32> -> vector<128x128xf32>
    %4 = vector.broadcast %2 : vector<1x128xf32> to vector<128x128xf32>
    %5 = arith.addf %3, %4 : vector<128x128xf32>
    %6 = math.tanh %5 : vector<128x128xf32>
    %c0_5 = arith.constant 0 : index
    %c0_6 = arith.constant 0 : index
    %7 = vector.load %arg4[%c0_5, %c0_6] : memref<128x128xf32, #tpu.memory_space<vmem>>, vector<128x128xf32>
    %c0_7 = arith.constant 0 : index
    %c0_8 = arith.constant 0 : index
    %8 = vector.load %arg5[%c0_7, %c0_8] : memref<1x128xf32, #tpu.memory_space<vmem>>, vector<1x128xf32>
    %cst_9 = arith.constant dense<0.000000e+00> : vector<128x128xf32>
    %9 = tpu.matmul %6, %7, %cst_9 {dimension_numbers = #tpu.dot_dimension_numbers<[1], [0], [0], [1], [0, 0, 1, 1], [], []>} : vector<128x128xf32>, vector<128x128xf32>, vector<128x128xf32> -> vector<128x128xf32>
    %10 = vector.broadcast %8 : vector<1x128xf32> to vector<128x128xf32>
    %11 = arith.addf %9, %10 : vector<128x128xf32>
    %12 = math.tanh %11 : vector<128x128xf32>
    %c0_10 = arith.constant 0 : index
    %c0_11 = arith.constant 0 : index
    %13 = vector.load %arg6[%c0_10, %c0_11] : memref<128x128xf32, #tpu.memory_space<vmem>>, vector<128x128xf32>
    %c0_12 = arith.constant 0 : index
    %c0_13 = arith.constant 0 : index
    %14 = vector.load %arg7[%c0_12, %c0_13] : memref<1x128xf32, #tpu.memory_space<vmem>>, vector<1x128xf32>
    %cst_14 = arith.constant dense<0.000000e+00> : vector<128x128xf32>
    %15 = tpu.matmul %12, %13, %cst_14 {dimension_numbers = #tpu.dot_dimension_numbers<[1], [0], [0], [1], [0, 0, 1, 1], [], []>} : vector<128x128xf32>, vector<128x128xf32>, vector<128x128xf32> -> vector<128x128xf32>
    %16 = vector.broadcast %14 : vector<1x128xf32> to vector<128x128xf32>
    %17 = arith.addf %15, %16 : vector<128x128xf32>
    %c0_15 = arith.constant 0 : index
    %c0_16 = arith.constant 0 : index
    %18 = vector.load %arg8[%c0_15, %c0_16] : memref<128x128xf32, #tpu.memory_space<vmem>>, vector<128x128xf32>
    tpu.vector_store %arg8[%c0_15, %c0_16], %17 {strides = array<i32>} : memref<128x128xf32, #tpu.memory_space<vmem>>, vector<128x128xf32>,
    return
  }
  func.func @transform_0(%arg0: i32) -> (i32, i32) {
    %c0_i32 = arith.constant 0 : i32
    %c0_i32_0 = arith.constant 0 : i32
    return %arg0, %c0_i32 : i32, i32
  }
  func.func @transform_1(%arg0: i32) -> (i32, i32) {
    %c0_i32 = arith.constant 0 : i32
    %c0_i32_0 = arith.constant 0 : i32
    %c0_i32_1 = arith.constant 0 : i32
    return %c0_i32, %c0_i32_0 : i32, i32
  }
  func.func @transform_2(%arg0: i32) -> (i32, i32) {
    %c0_i32 = arith.constant 0 : i32
    %c0_i32_0 = arith.constant 0 : i32
    %c0_i32_1 = arith.constant 0 : i32
    return %c0_i32, %c0_i32_0 : i32, i32
  }
  func.func @transform_3(%arg0: i32) -> (i32, i32) {
    %c0_i32 = arith.constant 0 : i32
    %c0_i32_0 = arith.constant 0 : i32
    %c0_i32_1 = arith.constant 0 : i32
    return %c0_i32, %c0_i32_0 : i32, i32
  }
  func.func @transform_4(%arg0: i32) -> (i32, i32) {
    %c0_i32 = arith.constant 0 : i32
    %c0_i32_0 = arith.constant 0 : i32
    %c0_i32_1 = arith.constant 0 : i32
    return %c0_i32, %c0_i32_0 : i32, i32
  }
  func.func @transform_5(%arg0: i32) -> (i32, i32) {
    %c0_i32 = arith.constant 0 : i32
    %c0_i32_0 = arith.constant 0 : i32
    %c0_i32_1 = arith.constant 0 : i32
    return %c0_i32, %c0_i32_0 : i32, i32
  }
  func.func @transform_6(%arg0: i32) -> (i32, i32) {
    %c0_i32 = arith.constant 0 : i32
    %c0_i32_0 = arith.constant 0 : i32
    %c0_i32_1 = arith.constant 0 : i32
    return %c0_i32, %c0_i32_0 : i32, i32
  }
  func.func @transform_7(%arg0: i32) -> (i32, i32) {
    %c0_i32 = arith.constant 0 : i32
    %c0_i32_0 = arith.constant 0 : i32
    return %arg0, %c0_i32 : i32, i32
  }
}

</mosaic_0001>

<llo_original>
// kernel: mlp_forward.1
$region0: #{mlp_forward.1}
  #allocation0 [shape = 'u32[]', space=smem, size = 0x4, offset = 0x4, fixed_abs, tag = 'smem constant byte address 0x4 - core index']
  #allocation1 [shape = 'u32[144,128]{1,0:T(1,128)}', space=vmem, size = 0x12000, scoped, tag = 'internal scratch']
  %s0 = inlined_call_operand.vmem [shape: f32[512,16], index: 0, kind: input, shape index: {}]
  %s1 = inlined_call_operand.vmem [shape: f32[16,128], index: 1, kind: input, shape index: {}]
  %s2 = inlined_call_operand.vmem [shape: f32[1,128], index: 2, kind: input, shape index: {}]
  %s3 = inlined_call_operand.vmem [shape: f32[128,128], index: 3, kind: input, shape index: {}]
  %s4 = inlined_call_operand.vmem [shape: f32[1,128], index: 4, kind: input, shape index: {}]
  %s5 = inlined_call_operand.vmem [shape: f32[128,128], index: 5, kind: input, shape index: {}]
  %s6 = inlined_call_operand.vmem [shape: f32[1,128], index: 6, kind: input, shape index: {}]
  %s7 = inlined_call_operand.vmem [shape: f32[512,128], index: 7, kind: output, shape index: {}]
  %s8 = sld [smem:[#allocation0]]
  $region61: #{mlp_forward.1} parent=0
    _
  %s10 = ssub.s32 1, %s8
  %s11 = scalar_select 0, %s10, %s8
  loop: start=0, step=1, limit=6
  $region2: #{mlp_forward.1} parent=0 // loop_pre_header
    _
  $region3: #{mlp_forward.1} parent=0 // loop_header
    %s13 = sphi 0, %s17
    %p14 = scmp.ge.s32.totalorder %s13, 6
    %s23 = sphi 0, %s25
    %s26 = sphi 0, %s23
    %s27 = sphi 0, %s26
    %s43 = sphi 0, %s27
    %s47 = sphi 0, %s47
    %s49 = sphi 0, %s47
    %s50 = sphi 0, %s49
    %s64 = sphi 0, %s50
    %s68 = sphi 0, %s68
    %s70 = sphi 0, %s68
    %s71 = sphi 0, %s70
    %s85 = sphi 0, %s71
    %s89 = sphi 0, %s89
    %s91 = sphi 0, %s89
    %s92 = sphi 0, %s91
    %s106 = sphi 0, %s92
    %s110 = sphi 0, %s110
    %s112 = sphi 0, %s110
    %s113 = sphi 0, %s112
    %s127 = sphi 0, %s113
    %s131 = sphi 0, %s131
    %s133 = sphi 0, %s131
    %s134 = sphi 0, %s133
    %s148 = sphi 0, %s134
    %s152 = sphi 0, %s152
    %s154 = sphi 0, %s152
    %s155 = sphi 0, %s154
    %s169 = sphi 0, %s155
    %s175 = sphi 0, %s177
    %s178 = sphi 0, %s175
    %s179 = sphi 0, %s178
    %s195 = sphi 0, %s179
  $region4: #{mlp_forward.1} parent=0 // loop_header_branch
    %16 = sbr.rel (%p14) target = $region8
  $region5: #{mlp_forward.1} parent=0 // loop_body
    %s18 = ssub.s32 %s13, 1
    %s19 = ssub.s32 %s13, 2
    %s20 = sadd.s32 %s13, 1
    %s21 = ssub.s32 %s13, %s20
    %p22 = scmp.eq.s32.totalorder %s21, 0
    %s24 = sadd.s32 %s23, 1
    %s25 = scalar_select %p22, %s23, %s24
    %p28 = pneg %p22
    %p29 = scmp.eq.s32.totalorder %s13, 3
    %p30 = por %p28, %p29
    %p31 = scmp.ne.s32.totalorder %s23, %s26
    %p32 = scmp.eq.s32.totalorder %s13, 0
    %p33 = por %p31, %p32
    %p34 = scmp.ne.s32.totalorder %s23, %s26
    %p35 = scmp.eq.s32.totalorder %s18, 3
    %p36 = por %p34, %p35
    %p37 = scmp.ne.s32.totalorder %s26, %s27
    %p38 = scmp.eq.s32.totalorder %s18, 0
    %p39 = por %p37, %p38
    %p40 = scmp.ne.s32.totalorder %s26, %s27
    %p41 = scmp.eq.s32.totalorder %s19, 3
    %p42 = por %p40, %p41
    %p44 = scmp.ne.s32.totalorder %s27, %s43
    %p45 = scmp.eq.s32.totalorder %s19, 0
    %p46 = por %p44, %p45
    %s48 = sadd.s32 %s47, 1
    %p51 = scmp.eq.s32.totalorder %s13, 3
    %p52 = scmp.ne.s32.totalorder %s47, %s49
    %p53 = scmp.eq.s32.totalorder %s13, 0
    %p54 = por %p52, %p53
    %p55 = scmp.ne.s32.totalorder %s47, %s49
    %p56 = scmp.eq.s32.totalorder %s18, 3
    %p57 = por %p55, %p56
    %p58 = scmp.ne.s32.totalorder %s49, %s50
    %p59 = scmp.eq.s32.totalorder %s18, 0
    %p60 = por %p58, %p59
    %p61 = scmp.ne.s32.totalorder %s49, %s50
    %p62 = scmp.eq.s32.totalorder %s19, 3
    %p63 = por %p61, %p62
    %p65 = scmp.ne.s32.totalorder %s50, %s64
    %p66 = scmp.eq.s32.totalorder %s19, 0
    %p67 = por %p65, %p66
    %s69 = sadd.s32 %s68, 1
    %p72 = scmp.eq.s32.totalorder %s13, 3
    %p73 = scmp.ne.s32.totalorder %s68, %s70
    %p74 = scmp.eq.s32.totalorder %s13, 0
    %p75 = por %p73, %p74
    %p76 = scmp.ne.s32.totalorder %s68, %s70
    %p77 = scmp.eq.s32.totalorder %s18, 3
    %p78 = por %p76, %p77
    %p79 = scmp.ne.s32.totalorder %s70, %s71
    %p80 = scmp.eq.s32.totalorder %s18, 0
    %p81 = por %p79, %p80
    %p82 = scmp.ne.s32.totalorder %s70, %s71
    %p83 = scmp.eq.s32.totalorder %s19, 3
    %p84 = por %p82, %p83
    %p86 = scmp.ne.s32.totalorder %s71, %s85
    %p87 = scmp.eq.s32.totalorder %s19, 0
    %p88 = por %p86, %p87
    %s90 = sadd.s32 %s89, 1
    %p93 = scmp.eq.s32.totalorder %s13, 3
    %p94 = scmp.ne.s32.totalorder %s89, %s91
    %p95 = scmp.eq.s32.totalorder %s13, 0
    %p96 = por %p94, %p95
    %p97 = scmp.ne.s32.totalorder %s89, %s91
    %p98 = scmp.eq.s32.totalorder %s18, 3
    %p99 = por %p97, %p98
    %p100 = scmp.ne.s32.totalorder %s91, %s92
    %p101 = scmp.eq.s32.totalorder %s18, 0
    %p102 = por %p100, %p101
    %p103 = scmp.ne.s32.totalorder %s91, %s92
    %p104 = scmp.eq.s32.totalorder %s19, 3
    %p105 = por %p103, %p104
    %p107 = scmp.ne.s32.totalorder %s92, %s106
    %p108 = scmp.eq.s32.totalorder %s19, 0
    %p109 = por %p107, %p108
    %s111 = sadd.s32 %s110, 1
    %p114 = scmp.eq.s32.totalorder %s13, 3
    %p115 = scmp.ne.s32.totalorder %s110, %s112
    %p116 = scmp.eq.s32.totalorder %s13, 0
    %p117 = por %p115, %p116
    %p118 = scmp.ne.s32.totalorder %s110, %s112
    %p119 = scmp.eq.s32.totalorder %s18, 3
    %p120 = por %p118, %p119
    %p121 = scmp.ne.s32.totalorder %s112, %s113
    %p122 = scmp.eq.s32.totalorder %s18, 0
    %p123 = por %p121, %p122
    %p124 = scmp.ne.s32.totalorder %s112, %s113
    %p125 = scmp.eq.s32.totalorder %s19, 3
    %p126 = por %p124, %p125
    %p128 = scmp.ne.s32.totalorder %s113, %s127
    %p129 = scmp.eq.s32.totalorder %s19, 0
    %p130 = por %p128, %p129
    %s132 = sadd.s32 %s131, 1
    %p135 = scmp.eq.s32.totalorder %s13, 3
    %p136 = scmp.ne.s32.totalorder %s131, %s133
    %p137 = scmp.eq.s32.totalorder %s13, 0
    %p138 = por %p136, %p137
    %p139 = scmp.ne.s32.totalorder %s131, %s133
    %p140 = scmp.eq.s32.totalorder %s18, 3
    %p141 = por %p139, %p140
    %p142 = scmp.ne.s32.totalorder %s133, %s134
    %p143 = scmp.eq.s32.totalorder %s18, 0
    %p144 = por %p142, %p143
    %p145 = scmp.ne.s32.totalorder %s133, %s134
    %p146 = scmp.eq.s32.totalorder %s19, 3
    %p147 = por %p145, %p146
    %p149 = scmp.ne.s32.totalorder %s134, %s148
    %p150 = scmp.eq.s32.totalorder %s19, 0
    %p151 = por %p149, %p150
    %s153 = sadd.s32 %s152, 1
    %p156 = scmp.eq.s32.totalorder %s13, 3
    %p157 = scmp.ne.s32.totalorder %s152, %s154
    %p158 = scmp.eq.s32.totalorder %s13, 0
    %p159 = por %p157, %p158
    %p160 = scmp.ne.s32.totalorder %s152, %s154
    %p161 = scmp.eq.s32.totalorder %s18, 3
    %p162 = por %p160, %p161
    %p163 = scmp.ne.s32.totalorder %s154, %s155
    %p164 = scmp.eq.s32.totalorder %s18, 0
    %p165 = por %p163, %p164
    %p166 = scmp.ne.s32.totalorder %s154, %s155
    %p167 = scmp.eq.s32.totalorder %s19, 3
    %p168 = por %p166, %p167
    %p170 = scmp.ne.s32.totalorder %s155, %s169
    %p171 = scmp.eq.s32.totalorder %s19, 0
    %p172 = por %p170, %p171
    %s173 = ssub.s32 %s13, %s20
    %p174 = scmp.eq.s32.totalorder %s173, 0
    %s176 = sadd.s32 %s175, 1
    %s177 = scalar_select %p174, %s175, %s176
    %p180 = pneg %p174
    %p181 = scmp.eq.s32.totalorder %s13, 3
    %p182 = por %p180, %p181
    %p183 = scmp.ne.s32.totalorder %s175, %s178
    %p184 = scmp.eq.s32.totalorder %s13, 0
    %p185 = por %p183, %p184
    %p186 = scmp.ne.s32.totalorder %s175, %s178
    %p187 = scmp.eq.s32.totalorder %s18, 3
    %p188 = por %p186, %p187
    %p189 = scmp.ne.s32.totalorder %s178, %s179
    %p190 = scmp.eq.s32.totalorder %s18, 0
    %p191 = por %p189, %p190
    %p192 = scmp.ne.s32.totalorder %s178, %s179
    %p193 = scmp.eq.s32.totalorder %s19, 3
    %p194 = por %p192, %p193
    %p196 = scmp.ne.s32.totalorder %s179, %s195
    %p197 = scmp.eq.s32.totalorder %s19, 0
    %p198 = por %p196, %p197
    %p199 = scmp.le.s32.totalorder 1, %s13
    %p200 = scmp.lt.s32.totalorder %s13, 5
    %p201 = pnand %p199, %p200
    %p202 = pneg %p201
    // Predicated region
    $region9: #{mlp_forward.1} parent=5 // pred_check
      _
    $region10: #{mlp_forward.1} parent=5 // pred_check_branch
      %204 = sbr.rel (%p201) target = $region12
    $region11: #{mlp_forward.1} parent=5 // pred_region
      %s205 = ssub.s32 %s13, 1
      // Predicated region
      $region13: #{mlp_forward.1} parent=11 // pred_check
        %p206 = pneg %p60
      $region14: #{mlp_forward.1} parent=11 // pred_check_branch
        %208 = sbr.rel (%p206) target = $region16
      $region15: #{mlp_forward.1} parent=11 // pred_region
        _
      $region16: #{mlp_forward.1} parent=11 // pred_fallthru
        _
      // Predicated region
      $region17: #{mlp_forward.1} parent=11 // pred_check
        %p209 = pneg %p81
      $region18: #{mlp_forward.1} parent=11 // pred_check_branch
        %211 = sbr.rel (%p209) target = $region20
      $region19: #{mlp_forward.1} parent=11 // pred_region
        _
      $region20: #{mlp_forward.1} parent=11 // pred_fallthru
        _
      // Predicated region
      $region21: #{mlp_forward.1} parent=11 // pred_check
        %p212 = pneg %p102
      $region22: #{mlp_forward.1} parent=11 // pred_check_branch
        %214 = sbr.rel (%p212) target = $region24
      $region23: #{mlp_forward.1} parent=11 // pred_region
        _
      $region24: #{mlp_forward.1} parent=11 // pred_fallthru
        _
      // Predicated region
      $region25: #{mlp_forward.1} parent=11 // pred_check
        %p215 = pneg %p123
      $region26: #{mlp_forward.1} parent=11 // pred_check_branch
        %217 = sbr.rel (%p215) target = $region28
      $region27: #{mlp_forward.1} parent=11 // pred_region
        _
      $region28: #{mlp_forward.1} parent=11 // pred_fallthru
        _
      // Predicated region
      $region29: #{mlp_forward.1} parent=11 // pred_check
        %p218 = pneg %p144
      $region30: #{mlp_forward.1} parent=11 // pred_check_branch
        %220 = sbr.rel (%p218) target = $region32
      $region31: #{mlp_forward.1} parent=11 // pred_region
        _
      $region32: #{mlp_forward.1} parent=11 // pred_fallthru
        _
      // Predicated region
      $region33: #{mlp_forward.1} parent=11 // pred_check
        %p221 = pneg %p165
      $region34: #{mlp_forward.1} parent=11 // pred_check_branch
        %223 = sbr.rel (%p221) target = $region36
      $region35: #{mlp_forward.1} parent=11 // pred_region
        _
      $region36: #{mlp_forward.1} parent=11 // pred_fallthru
        _
    $region12: #{mlp_forward.1} parent=5 // pred_fallthru
      _
    %p224 = scmp.lt.s32.totalorder %s13, 4
    // Predicated region
    $region37: #{mlp_forward.1} parent=5 // pred_check
      %p225 = pneg %p224
    $region38: #{mlp_forward.1} parent=5 // pred_check_branch
      %227 = sbr.rel (%p225) target = $region40
    $region39: #{mlp_forward.1} parent=5 // pred_region
      // Predicated region
      $region41: #{mlp_forward.1} parent=39 // pred_check
        %p228 = pneg %p33
      $region42: #{mlp_forward.1} parent=39 // pred_check_branch
        %230 = sbr.rel (%p228) target = $region44
      $region43: #{mlp_forward.1} parent=39 // pred_region
        %s231 = smul.u32 16, %s13
        %p232 = scmp.lt.s32.totalorder %s231, 63
        %s233 = scalar_select %p232, %s231, 63
        %s234 = smul.addr %s233, 8
        %s235 = scalar_lea.vmem %s0, %s234
        %s236 = smul.u32 16, %s13
      $region44: #{mlp_forward.1} parent=39 // pred_fallthru
        _
    $region40: #{mlp_forward.1} parent=5 // pred_fallthru
      _
    %p237 = scmp.le.s32.totalorder 1, %s13
    %p238 = scmp.lt.s32.totalorder %s13, 5
    %p239 = pnand %p237, %p238
    %p240 = pneg %p239
    // Predicated region
    $region45: #{mlp_forward.1} parent=5 // pred_check
      _
    $region46: #{mlp_forward.1} parent=5 // pred_check_branch
      %242 = sbr.rel (%p239) target = $region48
    $region47: #{mlp_forward.1} parent=5 // pred_region
      %s243 = ssub.s32 %s13, 1
      %s244 = smul.u32 16, %s18
      %p245 = scmp.lt.s32.totalorder %s244, 63
      %s246 = scalar_select %p245, %s244, 63
      %s247 = smul.addr %s246, 8
      %s248 = scalar_lea.vmem %s0, %s247
      %p249 = pneg %p39
      %p250 = pneg %p36
      %p251 = pneg %p60
      %p252 = pneg %p57
      %p253 = pneg %p81
      %p254 = pneg %p78
      %p255 = pneg %p102
      %p256 = pneg %p99
      %p257 = pneg %p123
      %p258 = pneg %p120
      %p259 = pneg %p144
      %p260 = pneg %p141
      %p261 = pneg %p165
      %p262 = pneg %p162
      %p263 = pneg %p191
      %p264 = pneg %p188
      %s265 = smul.u32 16, %s18
      %p266 = scmp.lt.s32.totalorder %s265, 63
      %s267 = scalar_select %p266, %s265, 63
      %s268 = smul.addr %s267, 8
      %s269 = scalar_lea.vmem %s7, %s268
      %s270 = smul.u32 16, %s18
      %p271 = scmp.lt.s32.totalorder %s270, 63
      %s272 = scalar_select %p271, %s270, 63
      %s273 = smul.addr %s272, 8
      %s274 = scalar_lea.vmem %s0, %s273
      %s275 = smul.u32 16, %s18
      %s276 = smul.u32 16, %s18
      %p277 = scmp.lt.s32.totalorder %s276, 63
      %s278 = scalar_select %p277, %s276, 63
      %s279 = smul.addr %s278, 8
      %s280 = scalar_lea.vmem %s7, %s279
      %s281 = smul.u32 16, %s18
      %v282 = vld [vmem:[%s274] sm:$0xff]
      %v283 = vld [vmem:[%s274 + $0x8] sm:$0xff]
      %v284 = vld [vmem:[%s274 + $0x10] sm:$0xff]
      %v285 = vld [vmem:[%s274 + $0x18] sm:$0xff]
      %v286 = vld [vmem:[%s274 + $0x20] sm:$0xff]
      %v287 = vld [vmem:[%s274 + $0x28] sm:$0xff]
      %v288 = vld [vmem:[%s274 + $0x30] sm:$0xff]
      %v289 = vld [vmem:[%s274 + $0x38] sm:$0xff]
      %v290 = vld [vmem:[%s274 + $0x40] sm:$0xff]
      %v291 = vld [vmem:[%s274 + $0x48] sm:$0xff]
      %v292 = vld [vmem:[%s274 + $0x50] sm:$0xff]
      %v293 = vld [vmem:[%s274 + $0x58] sm:$0xff]
      %v294 = vld [vmem:[%s274 + $0x60] sm:$0xff]
      %v295 = vld [vmem:[%s274 + $0x68] sm:$0xff]
      %v296 = vld [vmem:[%s274 + $0x70] sm:$0xff]
      %v297 = vld [vmem:[%s274 + $0x78] sm:$0xff]
      %v298 = vld [vmem:[%s1] sm:$0xff]
      %v299 = vld [vmem:[%s1 + $0x8] sm:$0xff]
      %v300 = vld [vmem:[%s2] sm:$0x1]
      %v302 = vlaneseq
      %v303 = vshrl.u32 %v302, 7
      %v304 = vsub.s32 0, %v303
      %v305 = vrot.slane %v300, %v304
      %vm307 = vcmask 130048
      %v309 = vsel %vm307, %v282, 0
      %v312 = vsel %vm307, %v283, 0
      %v315 = vsel %vm307, %v284, 0
      %v318 = vsel %vm307, %v285, 0
      %v321 = vsel %vm307, %v286, 0
      %v324 = vsel %vm307, %v287, 0
      %v327 = vsel %vm307, %v288, 0
      %v330 = vsel %vm307, %v289, 0
      %v333 = vsel %vm307, %v290, 0
      %v336 = vsel %vm307, %v291, 0
      %v339 = vsel %vm307, %v292, 0
      %v342 = vsel %vm307, %v293, 0
      %v345 = vsel %vm307, %v294, 0
      %v348 = vsel %vm307, %v295, 0
      %v351 = vsel %vm307, %v296, 0
      %v354 = vsel %vm307, %v297, 0
      %356 = vmatprep.subr.mxu0 0.0
      %357 = vmatpush1.msra.mxu0 %v298
      %358 = vmatprep.subr.mxu0 0.0
      %359 = vmatpush1.msra.mxu0 %v299
      %360 = vmatprep.subr.mxu0 0.0
      %361 = vmatpush1.msra.mxu0 0.0
      %362 = vmatprep.subr.mxu0 0.0
      %363 = vmatpush1.msra.mxu0 0.0
      %364 = vmatprep.subr.mxu0 0.0
      %365 = vmatpush1.msra.mxu0 0.0
      %366 = vmatprep.subr.mxu0 0.0
      %367 = vmatpush1.msra.mxu0 0.0
      %368 = vmatprep.subr.mxu0 0.0
      %369 = vmatpush1.msra.mxu0 0.0
      %370 = vmatprep.subr.mxu0 0.0
      %371 = vmatpush1.msra.mxu0 0.0
      %372 = vmatprep.subr.mxu0 0.0
      %373 = vmatpush1.msra.mxu0 0.0
      %374 = vmatprep.subr.mxu0 0.0
      %375 = vmatpush1.msra.mxu0 0.0
      %376 = vmatprep.subr.mxu0 0.0
      %377 = vmatpush1.msra.mxu0 0.0
      %378 = vmatprep.subr.mxu0 0.0
      %379 = vmatpush1.msra.mxu0 0.0
      %380 = vmatprep.subr.mxu0 0.0
      %381 = vmatpush1.msra.mxu0 0.0
      %382 = vmatprep.subr.mxu0 0.0
      %383 = vmatpush1.msra.mxu0 0.0
      %384 = vmatprep.subr.mxu0 0.0
      %385 = vmatpush1.msra.mxu0 0.0
      %386 = vmatprep.subr.mxu0 0.0
      %387 = vmatpush1.msra.mxu0 0.0
      %388 = vmatprep.subr.mxu0 0.0
      %389 = vmatpush1.msra.mxu0 0.0
      %390 = vmatprep.subr.mxu0 0.0
      %391 = vmatpush1.msra.mxu0 0.0
      %392 = vmatprep.subr.mxu0 0.0
      %393 = vmatpush1.msra.mxu0 0.0
      %394 = vmatprep.subr.mxu0 0.0
      %395 = vmatpush1.msra.mxu0 0.0
      %396 = vmatprep.subr.mxu0 0.0
      %397 = vmatpush1.msra.mxu0 0.0
      %398 = vmatprep.subr.mxu0 0.0
      %399 = vmatpush1.msra.mxu0 0.0
      %400 = vmatprep.subr.mxu0 0.0
      %401 = vmatpush1.msra.mxu0 0.0
      %402 = vmatprep.subr.mxu0 0.0
      %403 = vmatpush1.msra.mxu0 0.0
      %404 = vmatprep.subr.mxu0 0.0
      %405 = vmatpush1.msra.mxu0 0.0
      %406 = vmatprep.subr.mxu0 0.0
      %407 = vmatpush1.msra.mxu0 0.0
      %408 = vmatprep.subr.mxu0 0.0
      %409 = vmatpush1.msra.mxu0 0.0
      %410 = vmatprep.subr.mxu0 0.0
      %411 = vmatpush1.msra.mxu0 0.0
      %412 = vmatprep.subr.mxu0 0.0
      %413 = vmatpush1.msra.mxu0 0.0
      %414 = vmatprep.subr.mxu0 0.0
      %415 = vmatpush1.msra.mxu0 0.0
      %416 = vmatprep.subr.mxu0 0.0
      %417 = vmatpush1.msra.mxu0 0.0
      %418 = vmatprep.subr.mxu0 0.0
      %419 = vmatpush1.msra.mxu0 0.0
      %420 = vmatprep.mubr.f32.mxu0 0.0
      %421 = vmatmul.mubr.f32.gmra.mrb[0].mxu0 %v309
      %v422 = vpop.f32.mrb[0].mxu0
      %v423 = vadd.f32 %v305, %v422
      %v424 = vpop.f32.mrb[0].mxu0
      %425 = vmatprep.mubr.f32.mxu0 0.0
      %426 = vmatmul.mubr.f32.gmra.mrb[0].mxu0 %v312
      %v427 = vpop.f32.mrb[0].mxu0
      %v428 = vadd.f32 %v305, %v427
      %v429 = vpop.f32.mrb[0].mxu0
      %430 = vmatprep.mubr.f32.mxu0 0.0
      %431 = vmatmul.mubr.f32.gmra.mrb[0].mxu0 %v315
      %v432 = vpop.f32.mrb[0].mxu0
      %v433 = vadd.f32 %v305, %v432
      %v434 = vpop.f32.mrb[0].mxu0
      %435 = vmatprep.mubr.f32.mxu0 0.0
      %436 = vmatmul.mubr.f32.gmra.mrb[0].mxu0 %v318
      %v437 = vpop.f32.mrb[0].mxu0
      %v438 = vadd.f32 %v305, %v437
      %v439 = vpop.f32.mrb[0].mxu0
      %440 = vmatprep.mubr.f32.mxu0 0.0
      %441 = vmatmul.mubr.f32.gmra.mrb[0].mxu0 %v321
      %v442 = vpop.f32.mrb[0].mxu0
      %v443 = vadd.f32 %v305, %v442
      %v444 = vpop.f32.mrb[0].mxu0
      %445 = vmatprep.mubr.f32.mxu0 0.0
      %446 = vmatmul.mubr.f32.gmra.mrb[0].mxu0 %v324
      %v447 = vpop.f32.mrb[0].mxu0
      %v448 = vadd.f32 %v305, %v447
      %v449 = vpop.f32.mrb[0].mxu0
      %450 = vmatprep.mubr.f32.mxu0 0.0
      %451 = vmatmul.mubr.f32.gmra.mrb[0].mxu0 %v327
      %v452 = vpop.f32.mrb[0].mxu0
      %v453 = vadd.f32 %v305, %v452
      %v454 = vpop.f32.mrb[0].mxu0
      %455 = vmatprep.mubr.f32.mxu0 0.0
      %456 = vmatmul.mubr.f32.gmra.mrb[0].mxu0 %v330
      %v457 = vpop.f32.mrb[0].mxu0
      %v458 = vadd.f32 %v305, %v457
      %v459 = vpop.f32.mrb[0].mxu0
      %460 = vmatprep.mubr.f32.mxu0 0.0
      %461 = vmatmul.mubr.f32.gmra.mrb[0].mxu0 %v333
      %v462 = vpop.f32.mrb[0].mxu0
      %v463 = vadd.f32 %v305, %v462
      %v464 = vpop.f32.mrb[0].mxu0
      %465 = vmatprep.mubr.f32.mxu0 0.0
      %466 = vmatmul.mubr.f32.gmra.mrb[0].mxu0 %v336
      %v467 = vpop.f32.mrb[0].mxu0
      %v468 = vadd.f32 %v305, %v467
      %v469 = vpop.f32.mrb[0].mxu0
      %470 = vmatprep.mubr.f32.mxu0 0.0
      %471 = vmatmul.mubr.f32.gmra.mrb[0].mxu0 %v339
      %v472 = vpop.f32.mrb[0].mxu0
      %v473 = vadd.f32 %v305, %v472
      %v474 = vpop.f32.mrb[0].mxu0
      %475 = vmatprep.mubr.f32.mxu0 0.0
      %476 = vmatmul.mubr.f32.gmra.mrb[0].mxu0 %v342
      %v477 = vpop.f32.mrb[0].mxu0
      %v478 = vadd.f32 %v305, %v477
      %v479 = vpop.f32.mrb[0].mxu0
      %480 = vmatprep.mubr.f32.mxu0 0.0
      %481 = vmatmul.mubr.f32.gmra.mrb[0].mxu0 %v345
      %v482 = vpop.f32.mrb[0].mxu0
      %v483 = vadd.f32 %v305, %v482
      %v484 = vpop.f32.mrb[0].mxu0
      %485 = vmatprep.mubr.f32.mxu0 0.0
      %486 = vmatmul.mubr.f32.gmra.mrb[0].mxu0 %v348
      %v487 = vpop.f32.mrb[0].mxu0
      %v488 = vadd.f32 %v305, %v487
      %v489 = vpop.f32.mrb[0].mxu0
      %490 = vmatprep.mubr.f32.mxu0 0.0
      %491 = vmatmul.mubr.f32.gmra.mrb[0].mxu0 %v351
      %v492 = vpop.f32.mrb[0].mxu0
      %v493 = vadd.f32 %v305, %v492
      %v494 = vpop.f32.mrb[0].mxu0
      %495 = vmatprep.mubr.f32.mxu0 0.0
      %496 = vmatmul.mubr.f32.gmra.mrb[0].mxu0 %v354
      %v497 = vpop.f32.mrb[0].mxu0
      %v498 = vadd.f32 %v305, %v497
      %v499 = vpop.f32.mrb[0].mxu0
      %500 = vdwg.mxu0
      %v501 = vtanh.pop %v423
      %v502 = vtanh.pop %v428
      %v503 = vtanh.pop %v433
      %v504 = vtanh.pop %v438
      %v505 = vtanh.pop %v443
      %v506 = vtanh.pop %v448
      %v507 = vtanh.pop %v453
      %v508 = vtanh.pop %v458
      %v509 = vtanh.pop %v463
      %v510 = vtanh.pop %v468
      %v511 = vtanh.pop %v473
      %v512 = vtanh.pop %v478
      %v513 = vtanh.pop %v483
      %v514 = vtanh.pop %v488
      %v515 = vtanh.pop %v493
      %v516 = vtanh.pop %v498
      %v517 = vld [vmem:[%s3] sm:$0xff]
      %v518 = vld [vmem:[%s3 + $0x8] sm:$0xff]
      %v519 = vld [vmem:[%s3 + $0x10] sm:$0xff]
      %v520 = vld [vmem:[%s3 + $0x18] sm:$0xff]
      %v521 = vld [vmem:[%s3 + $0x20] sm:$0xff]
      %v522 = vld [vmem:[%s3 + $0x28] sm:$0xff]
      %v523 = vld [vmem:[%s3 + $0x30] sm:$0xff]
      %v524 = vld [vmem:[%s3 + $0x38] sm:$0xff]
      %v525 = vld [vmem:[%s3 + $0x40] sm:$0xff]
      %v526 = vld [vmem:[%s3 + $0x48] sm:$0xff]
      %v527 = vld [vmem:[%s3 + $0x50] sm:$0xff]
      %v528 = vld [vmem:[%s3 + $0x58] sm:$0xff]
      %v529 = vld [vmem:[%s3 + $0x60] sm:$0xff]
      %v530 = vld [vmem:[%s3 + $0x68] sm:$0xff]
      %v531 = vld [vmem:[%s3 + $0x70] sm:$0xff]
      %v532 = vld [vmem:[%s3 + $0x78] sm:$0xff]
      %v533 = vld [vmem:[%s4] sm:$0x1]
      %v535 = vlaneseq
      %v536 = vshrl.u32 %v535, 7
      %v537 = vsub.s32 0, %v536
      %v538 = vrot.slane %v533, %v537
      %540 = vmatprep.subr.mxu0 0.0
      %541 = vmatpush1.msra.mxu0 %v517
      %542 = vmatprep.subr.mxu0 0.0
      %543 = vmatpush1.msra.mxu0 %v518
      %544 = vmatprep.subr.mxu0 0.0
      %545 = vmatpush1.msra.mxu0 %v519
      %546 = vmatprep.subr.mxu0 0.0
      %547 = vmatpush1.msra.mxu0 %v520
      %548 = vmatprep.subr.mxu0 0.0
      %549 = vmatpush1.msra.mxu0 %v521
      %550 = vmatprep.subr.mxu0 0.0
      %551 = vmatpush1.msra.mxu0 %v522
      %552 = vmatprep.subr.mxu0 0.0
      %553 = vmatpush1.msra.mxu0 %v523
      %554 = vmatprep.subr.mxu0 0.0
      %555 = vmatpush1.msra.mxu0 %v524
      %556 = vmatprep.subr.mxu0 0.0
      %557 = vmatpush1.msra.mxu0 %v525
      %558 = vmatprep.subr.mxu0 0.0
      %559 = vmatpush1.msra.mxu0 %v526
      %560 = vmatprep.subr.mxu0 0.0
      %561 = vmatpush1.msra.mxu0 %v527
      %562 = vmatprep.subr.mxu0 0.0
      %563 = vmatpush1.msra.mxu0 %v528
      %564 = vmatprep.subr.mxu0 0.0
      %565 = vmatpush1.msra.mxu0 %v529
      %566 = vmatprep.subr.mxu0 0.0
      %567 = vmatpush1.msra.mxu0 %v530
      %568 = vmatprep.subr.mxu0 0.0
      %569 = vmatpush1.msra.mxu0 %v531
      %570 = vmatprep.subr.mxu0 0.0
      %571 = vmatpush1.msra.mxu0 %v532
      %572 = vmatprep.subr.mxu0 0.0
      %573 = vmatpush1.msra.mxu0 0.0
      %574 = vmatprep.subr.mxu0 0.0
      %575 = vmatpush1.msra.mxu0 0.0
      %576 = vmatprep.subr.mxu0 0.0
      %577 = vmatpush1.msra.mxu0 0.0
      %578 = vmatprep.subr.mxu0 0.0
      %579 = vmatpush1.msra.mxu0 0.0
      %580 = vmatprep.subr.mxu0 0.0
      %581 = vmatpush1.msra.mxu0 0.0
      %582 = vmatprep.subr.mxu0 0.0
      %583 = vmatpush1.msra.mxu0 0.0
      %584 = vmatprep.subr.mxu0 0.0
      %585 = vmatpush1.msra.mxu0 0.0
      %586 = vmatprep.subr.mxu0 0.0
      %587 = vmatpush1.msra.mxu0 0.0
      %588 = vmatprep.subr.mxu0 0.0
      %589 = vmatpush1.msra.mxu0 0.0
      %590 = vmatprep.subr.mxu0 0.0
      %591 = vmatpush1.msra.mxu0 0.0
      %592 = vmatprep.subr.mxu0 0.0
      %593 = vmatpush1.msra.mxu0 0.0
      %594 = vmatprep.subr.mxu0 0.0
      %595 = vmatpush1.msra.mxu0 0.0
      %596 = vmatprep.subr.mxu0 0.0
      %597 = vmatpush1.msra.mxu0 0.0
      %598 = vmatprep.subr.mxu0 0.0
      %599 = vmatpush1.msra.mxu0 0.0
      %600 = vmatprep.subr.mxu0 0.0
      %601 = vmatpush1.msra.mxu0 0.0
      %602 = vmatprep.subr.mxu0 0.0
      %603 = vmatpush1.msra.mxu0 0.0
      %604 = vmatprep.mubr.f32.mxu0 0.0
      %605 = vmatmul.mubr.f32.gmra.mrb[0].mxu0 %v501
      %v606 = vpop.f32.mrb[0].mxu0
      %v607 = vadd.f32 %v538, %v606
      %v608 = vpop.f32.mrb[0].mxu0
      %609 = vmatprep.mubr.f32.mxu0 0.0
      %610 = vmatmul.mubr.f32.gmra.mrb[0].mxu0 %v502
      %v611 = vpop.f32.mrb[0].mxu0
      %v612 = vadd.f32 %v538, %v611
      %v613 = vpop.f32.mrb[0].mxu0
      %614 = vmatprep.mubr.f32.mxu0 0.0
      %615 = vmatmul.mubr.f32.gmra.mrb[0].mxu0 %v503
      %v616 = vpop.f32.mrb[0].mxu0
      %v617 = vadd.f32 %v538, %v616
      %v618 = vpop.f32.mrb[0].mxu0
      %619 = vmatprep.mubr.f32.mxu0 0.0
      %620 = vmatmul.mubr.f32.gmra.mrb[0].mxu0 %v504
      %v621 = vpop.f32.mrb[0].mxu0
      %v622 = vadd.f32 %v538, %v621
      %v623 = vpop.f32.mrb[0].mxu0
      %624 = vmatprep.mubr.f32.mxu0 0.0
      %625 = vmatmul.mubr.f32.gmra.mrb[0].mxu0 %v505
      %v626 = vpop.f32.mrb[0].mxu0
      %v627 = vadd.f32 %v538, %v626
      %v628 = vpop.f32.mrb[0].mxu0
      %629 = vmatprep.mubr.f32.mxu0 0.0
      %630 = vmatmul.mubr.f32.gmra.mrb[0].mxu0 %v506
      %v631 = vpop.f32.mrb[0].mxu0
      %v632 = vadd.f32 %v538, %v631
      %v633 = vpop.f32.mrb[0].mxu0
      %634 = vmatprep.mubr.f32.mxu0 0.0
      %635 = vmatmul.mubr.f32.gmra.mrb[0].mxu0 %v507
      %v636 = vpop.f32.mrb[0].mxu0
      %v637 = vadd.f32 %v538, %v636
      %v638 = vpop.f32.mrb[0].mxu0
      %639 = vmatprep.mubr.f32.mxu0 0.0
      %640 = vmatmul.mubr.f32.gmra.mrb[0].mxu0 %v508
      %v641 = vpop.f32.mrb[0].mxu0
      %v642 = vadd.f32 %v538, %v641
      %v643 = vpop.f32.mrb[0].mxu0
      %644 = vmatprep.mubr.f32.mxu0 0.0
      %645 = vmatmul.mubr.f32.gmra.mrb[0].mxu0 %v509
      %v646 = vpop.f32.mrb[0].mxu0
      %v647 = vadd.f32 %v538, %v646
      %v648 = vpop.f32.mrb[0].mxu0
      %649 = vmatprep.mubr.f32.mxu0 0.0
      %650 = vmatmul.mubr.f32.gmra.mrb[0].mxu0 %v510
      %v651 = vpop.f32.mrb[0].mxu0
      %v652 = vadd.f32 %v538, %v651
      %v653 = vpop.f32.mrb[0].mxu0
      %654 = vmatprep.mubr.f32.mxu0 0.0
      %655 = vmatmul.mubr.f32.gmra.mrb[0].mxu0 %v511
      %v656 = vpop.f32.mrb[0].mxu0
      %v657 = vadd.f32 %v538, %v656
      %v658 = vpop.f32.mrb[0].mxu0
      %659 = vmatprep.mubr.f32.mxu0 0.0
      %660 = vmatmul.mubr.f32.gmra.mrb[0].mxu0 %v512
      %v661 = vpop.f32.mrb[0].mxu0
      %v662 = vadd.f32 %v538, %v661
      %v663 = vpop.f32.mrb[0].mxu0
      %664 = vmatprep.mubr.f32.mxu0 0.0
      %665 = vmatmul.mubr.f32.gmra.mrb[0].mxu0 %v513
      %v666 = vpop.f32.mrb[0].mxu0
      %v667 = vadd.f32 %v538, %v666
      %v668 = vpop.f32.mrb[0].mxu0
      %669 = vmatprep.mubr.f32.mxu0 0.0
      %670 = vmatmul.mubr.f32.gmra.mrb[0].mxu0 %v514
      %v671 = vpop.f32.mrb[0].mxu0
      %v672 = vadd.f32 %v538, %v671
      %v673 = vpop.f32.mrb[0].mxu0
      %674 = vmatprep.mubr.f32.mxu0 0.0
      %675 = vmatmul.mubr.f32.gmra.mrb[0].mxu0 %v515
      %v676 = vpop.f32.mrb[0].mxu0
      %v677 = vadd.f32 %v538, %v676
      %v678 = vpop.f32.mrb[0].mxu0
      %679 = vmatprep.mubr.f32.mxu0 0.0
      %680 = vmatmul.mubr.f32.gmra.mrb[0].mxu0 %v516
      %v681 = vpop.f32.mrb[0].mxu0
      %v682 = vadd.f32 %v538, %v681
      %v683 = vpop.f32.mrb[0].mxu0
      %684 = vdwg.mxu0
      %v685 = vtanh.pop %v607
      %v686 = vtanh.pop %v612
      %v687 = vtanh.pop %v617
      %v688 = vtanh.pop %v622
      %v689 = vtanh.pop %v627
      %v690 = vtanh.pop %v632
      %v691 = vtanh.pop %v637
      %v692 = vtanh.pop %v642
      %v693 = vtanh.pop %v647
      %v694 = vtanh.pop %v652
      %v695 = vtanh.pop %v657
      %v696 = vtanh.pop %v662
      %v697 = vtanh.pop %v667
      %v698 = vtanh.pop %v672
      %v699 = vtanh.pop %v677
      %v700 = vtanh.pop %v682
      %v701 = vld [vmem:[%s5] sm:$0xff]
      %v702 = vld [vmem:[%s5 + $0x8] sm:$0xff]
      %v703 = vld [vmem:[%s5 + $0x10] sm:$0xff]
      %v704 = vld [vmem:[%s5 + $0x18] sm:$0xff]
      %v705 = vld [vmem:[%s5 + $0x20] sm:$0xff]
      %v706 = vld [vmem:[%s5 + $0x28] sm:$0xff]
      %v707 = vld [vmem:[%s5 + $0x30] sm:$0xff]
      %v708 = vld [vmem:[%s5 + $0x38] sm:$0xff]
      %v709 = vld [vmem:[%s5 + $0x40] sm:$0xff]
      %v710 = vld [vmem:[%s5 + $0x48] sm:$0xff]
      %v711 = vld [vmem:[%s5 + $0x50] sm:$0xff]
      %v712 = vld [vmem:[%s5 + $0x58] sm:$0xff]
      %v713 = vld [vmem:[%s5 + $0x60] sm:$0xff]
      %v714 = vld [vmem:[%s5 + $0x68] sm:$0xff]
      %v715 = vld [vmem:[%s5 + $0x70] sm:$0xff]
      %v716 = vld [vmem:[%s5 + $0x78] sm:$0xff]
      %v717 = vld [vmem:[%s6] sm:$0x1]
      %v719 = vlaneseq
      %v720 = vshrl.u32 %v719, 7
      %v721 = vsub.s32 0, %v720
      %v722 = vrot.slane %v717, %v721
      %724 = vmatprep.subr.mxu0 0.0
      %725 = vmatpush1.msra.mxu0 %v701
      %726 = vmatprep.subr.mxu0 0.0
      %727 = vmatpush1.msra.mxu0 %v702
      %728 = vmatprep.subr.mxu0 0.0
      %729 = vmatpush1.msra.mxu0 %v703
      %730 = vmatprep.subr.mxu0 0.0
      %731 = vmatpush1.msra.mxu0 %v704
      %732 = vmatprep.subr.mxu0 0.0
      %733 = vmatpush1.msra.mxu0 %v705
      %734 = vmatprep.subr.mxu0 0.0
      %735 = vmatpush1.msra.mxu0 %v706
      %736 = vmatprep.subr.mxu0 0.0
      %737 = vmatpush1.msra.mxu0 %v707
      %738 = vmatprep.subr.mxu0 0.0
      %739 = vmatpush1.msra.mxu0 %v708
      %740 = vmatprep.subr.mxu0 0.0
      %741 = vmatpush1.msra.mxu0 %v709
      %742 = vmatprep.subr.mxu0 0.0
      %743 = vmatpush1.msra.mxu0 %v710
      %744 = vmatprep.subr.mxu0 0.0
      %745 = vmatpush1.msra.mxu0 %v711
      %746 = vmatprep.subr.mxu0 0.0
      %747 = vmatpush1.msra.mxu0 %v712
      %748 = vmatprep.subr.mxu0 0.0
      %749 = vmatpush1.msra.mxu0 %v713
      %750 = vmatprep.subr.mxu0 0.0
      %751 = vmatpush1.msra.mxu0 %v714
      %752 = vmatprep.subr.mxu0 0.0
      %753 = vmatpush1.msra.mxu0 %v715
      %754 = vmatprep.subr.mxu0 0.0
      %755 = vmatpush1.msra.mxu0 %v716
      %756 = vmatprep.subr.mxu0 0.0
      %757 = vmatpush1.msra.mxu0 0.0
      %758 = vmatprep.subr.mxu0 0.0
      %759 = vmatpush1.msra.mxu0 0.0
      %760 = vmatprep.subr.mxu0 0.0
      %761 = vmatpush1.msra.mxu0 0.0
      %762 = vmatprep.subr.mxu0 0.0
      %763 = vmatpush1.msra.mxu0 0.0
      %764 = vmatprep.subr.mxu0 0.0
      %765 = vmatpush1.msra.mxu0 0.0
      %766 = vmatprep.subr.mxu0 0.0
      %767 = vmatpush1.msra.mxu0 0.0
      %768 = vmatprep.subr.mxu0 0.0
      %769 = vmatpush1.msra.mxu0 0.0
      %770 = vmatprep.subr.mxu0 0.0
      %771 = vmatpush1.msra.mxu0 0.0
      %772 = vmatprep.subr.mxu0 0.0
      %773 = vmatpush1.msra.mxu0 0.0
      %774 = vmatprep.subr.mxu0 0.0
      %775 = vmatpush1.msra.mxu0 0.0
      %776 = vmatprep.subr.mxu0 0.0
      %777 = vmatpush1.msra.mxu0 0.0
      %778 = vmatprep.subr.mxu0 0.0
      %779 = vmatpush1.msra.mxu0 0.0
      %780 = vmatprep.subr.mxu0 0.0
      %781 = vmatpush1.msra.mxu0 0.0
      %782 = vmatprep.subr.mxu0 0.0
      %783 = vmatpush1.msra.mxu0 0.0
      %784 = vmatprep.subr.mxu0 0.0
      %785 = vmatpush1.msra.mxu0 0.0
      %786 = vmatprep.subr.mxu0 0.0
      %787 = vmatpush1.msra.mxu0 0.0
      %788 = vmatprep.mubr.f32.mxu0 0.0
      %789 = vmatmul.mubr.f32.gmra.mrb[0].mxu0 %v685
      %v790 = vpop.f32.mrb[0].mxu0
      %v791 = vadd.f32 %v722, %v790
      %v792 = vpop.f32.mrb[0].mxu0
      %793 = vmatprep.mubr.f32.mxu0 0.0
      %794 = vmatmul.mubr.f32.gmra.mrb[0].mxu0 %v686
      %v795 = vpop.f32.mrb[0].mxu0
      %v796 = vadd.f32 %v722, %v795
      %v797 = vpop.f32.mrb[0].mxu0
      %798 = vmatprep.mubr.f32.mxu0 0.0
      %799 = vmatmul.mubr.f32.gmra.mrb[0].mxu0 %v687
      %v800 = vpop.f32.mrb[0].mxu0
      %v801 = vadd.f32 %v722, %v800
      %v802 = vpop.f32.mrb[0].mxu0
      %803 = vmatprep.mubr.f32.mxu0 0.0
      %804 = vmatmul.mubr.f32.gmra.mrb[0].mxu0 %v688
      %v805 = vpop.f32.mrb[0].mxu0
      %v806 = vadd.f32 %v722, %v805
      %v807 = vpop.f32.mrb[0].mxu0
      %808 = vmatprep.mubr.f32.mxu0 0.0
      %809 = vmatmul.mubr.f32.gmra.mrb[0].mxu0 %v689
      %v810 = vpop.f32.mrb[0].mxu0
      %v811 = vadd.f32 %v722, %v810
      %v812 = vpop.f32.mrb[0].mxu0
      %813 = vmatprep.mubr.f32.mxu0 0.0
      %814 = vmatmul.mubr.f32.gmra.mrb[0].mxu0 %v690
      %v815 = vpop.f32.mrb[0].mxu0
      %v816 = vadd.f32 %v722, %v815
      %v817 = vpop.f32.mrb[0].mxu0
      %818 = vmatprep.mubr.f32.mxu0 0.0
      %819 = vmatmul.mubr.f32.gmra.mrb[0].mxu0 %v691
      %v820 = vpop.f32.mrb[0].mxu0
      %v821 = vadd.f32 %v722, %v820
      %v822 = vpop.f32.mrb[0].mxu0
      %823 = vmatprep.mubr.f32.mxu0 0.0
      %824 = vmatmul.mubr.f32.gmra.mrb[0].mxu0 %v692
      %v825 = vpop.f32.mrb[0].mxu0
      %v826 = vadd.f32 %v722, %v825
      %v827 = vpop.f32.mrb[0].mxu0
      %828 = vmatprep.mubr.f32.mxu0 0.0
      %829 = vmatmul.mubr.f32.gmra.mrb[0].mxu0 %v693
      %v830 = vpop.f32.mrb[0].mxu0
      %v831 = vadd.f32 %v722, %v830
      %v832 = vpop.f32.mrb[0].mxu0
      %833 = vmatprep.mubr.f32.mxu0 0.0
      %834 = vmatmul.mubr.f32.gmra.mrb[0].mxu0 %v694
      %v835 = vpop.f32.mrb[0].mxu0
      %v836 = vadd.f32 %v722, %v835
      %v837 = vpop.f32.mrb[0].mxu0
      %838 = vmatprep.mubr.f32.mxu0 0.0
      %839 = vmatmul.mubr.f32.gmra.mrb[0].mxu0 %v695
      %v840 = vpop.f32.mrb[0].mxu0
      %v841 = vadd.f32 %v722, %v840
      %v842 = vpop.f32.mrb[0].mxu0
      %843 = vmatprep.mubr.f32.mxu0 0.0
      %844 = vmatmul.mubr.f32.gmra.mrb[0].mxu0 %v696
      %v845 = vpop.f32.mrb[0].mxu0
      %v846 = vadd.f32 %v722, %v845
      %v847 = vpop.f32.mrb[0].mxu0
      %848 = vmatprep.mubr.f32.mxu0 0.0
      %849 = vmatmul.mubr.f32.gmra.mrb[0].mxu0 %v697
      %v850 = vpop.f32.mrb[0].mxu0
      %v851 = vadd.f32 %v722, %v850
      %v852 = vpop.f32.mrb[0].mxu0
      %853 = vmatprep.mubr.f32.mxu0 0.0
      %854 = vmatmul.mubr.f32.gmra.mrb[0].mxu0 %v698
      %v855 = vpop.f32.mrb[0].mxu0
      %v856 = vadd.f32 %v722, %v855
      %v857 = vpop.f32.mrb[0].mxu0
      %858 = vmatprep.mubr.f32.mxu0 0.0
      %859 = vmatmul.mubr.f32.gmra.mrb[0].mxu0 %v699
      %v860 = vpop.f32.mrb[0].mxu0
      %v861 = vadd.f32 %v722, %v860
      %v862 = vpop.f32.mrb[0].mxu0
      %863 = vmatprep.mubr.f32.mxu0 0.0
      %864 = vmatmul.mubr.f32.gmra.mrb[0].mxu0 %v700
      %v865 = vpop.f32.mrb[0].mxu0
      %v866 = vadd.f32 %v722, %v865
      %v867 = vpop.f32.mrb[0].mxu0
      %868 = vdwg.mxu0
      %869 = vst [vmem:[%s280] sm:$0xff] %v791
      %870 = vst [vmem:[%s280 + $0x8] sm:$0xff] %v796
      %871 = vst [vmem:[%s280 + $0x10] sm:$0xff] %v801
      %872 = vst [vmem:[%s280 + $0x18] sm:$0xff] %v806
      %873 = vst [vmem:[%s280 + $0x20] sm:$0xff] %v811
      %874 = vst [vmem:[%s280 + $0x28] sm:$0xff] %v816
      %875 = vst [vmem:[%s280 + $0x30] sm:$0xff] %v821
      %876 = vst [vmem:[%s280 + $0x38] sm:$0xff] %v826
      %877 = vst [vmem:[%s280 + $0x40] sm:$0xff] %v831
      %878 = vst [vmem:[%s280 + $0x48] sm:$0xff] %v836
      %879 = vst [vmem:[%s280 + $0x50] sm:$0xff] %v841
      %880 = vst [vmem:[%s280 + $0x58] sm:$0xff] %v846
      %881 = vst [vmem:[%s280 + $0x60] sm:$0xff] %v851
      %882 = vst [vmem:[%s280 + $0x68] sm:$0xff] %v856
      %883 = vst [vmem:[%s280 + $0x70] sm:$0xff] %v861
      %884 = vst [vmem:[%s280 + $0x78] sm:$0xff] %v866
      %s885 = smul.u32 16, %s18
      %p886 = scmp.lt.s32.totalorder %s885, 63
      %s887 = scalar_select %p886, %s885, 63
      %s888 = smul.addr %s887, 8
      %s889 = scalar_lea.vmem %s7, %s888
      // Predicated region
      $region49: #{mlp_forward.1} parent=47 // pred_check
        %p890 = pneg %p188
      $region50: #{mlp_forward.1} parent=47 // pred_check_branch
        %892 = sbr.rel (%p890) target = $region52
      $region51: #{mlp_forward.1} parent=47 // pred_region
        %s893 = smul.u32 16, %s18
      $region52: #{mlp_forward.1} parent=47 // pred_fallthru
        _
    $region48: #{mlp_forward.1} parent=5 // pred_fallthru
      _
    %p894 = scmp.le.s32.totalorder 2, %s13
    // Predicated region
    $region53: #{mlp_forward.1} parent=5 // pred_check
      %p895 = pneg %p894
    $region54: #{mlp_forward.1} parent=5 // pred_check_branch
      %897 = sbr.rel (%p895) target = $region56
    $region55: #{mlp_forward.1} parent=5 // pred_region
      %s898 = ssub.s32 %s13, 2
      // Predicated region
      $region57: #{mlp_forward.1} parent=55 // pred_check
        %p899 = pneg %p194
      $region58: #{mlp_forward.1} parent=55 // pred_check_branch
        %901 = sbr.rel (%p899) target = $region60
      $region59: #{mlp_forward.1} parent=55 // pred_region
        %s902 = smul.u32 16, %s19
        %p903 = scmp.lt.s32.totalorder %s902, 63
        %s904 = scalar_select %p903, %s902, 63
        %s905 = smul.addr %s904, 8
        %s906 = scalar_lea.vmem %s7, %s905
      $region60: #{mlp_forward.1} parent=55 // pred_fallthru
        _
    $region56: #{mlp_forward.1} parent=5 // pred_fallthru
      _
  $region6: #{mlp_forward.1} parent=0 // loop_footer
    %s17 = sadd.s32 1, %s13
  $region7: #{mlp_forward.1} parent=0 // loop_footer_branch
    %12 = sbr.rel target = $region3
  $region8: #{mlp_forward.1} parent=0 // loop_exit
    _

</llo_original>
